<compile_context>
chip_gen: v6e
topology: v6e:2x2x1
jax: 0.10.0
libtpu: 0.0.40
codegen_flags: <defaults>
</compile_context>

<pallas_src>
import functools

import jax
import jax.numpy as jnp
from jax.experimental import pallas as pl
from jax.experimental.pallas import tpu as pltpu

# ---- problem sizes (small, consistent with the module) ----
B = 2          # batch
S = 8          # sequence length
H = 32         # backbone hidden_size
FC1 = 16       # fc1 output dim (fixed by the module)
NUM_CLASS = 4  # num_class

LANE = 128       # lane-dense padded class dimension
NEG_INF = -1e30
MAX_BLOCK_B = 2048  # batch-tile cap (VMEM-safe on v5e/v6e/v7x with the 2-D layout)


def _round_up(x, m):
    return -(-x // m) * m


def head_kernel(hid_ref, w1f_ref, b1_ref, w2_ref, b2_ref, out_ref):
    # hid_ref: [TB, S*H] lane-dense. w1f already folds the 1/S mean scale and
    # the seq-tiling into a [S*H, FC1] weight, so a single MXU matmul
    # implements mean-pool + fc1.
    x = jnp.dot(hid_ref[...], w1f_ref[...],
                preferred_element_type=jnp.float32)                      # [TB, FC1]
    x = jnp.maximum(x + b1_ref[...], 0.0)                                # ReLU

    # logits = fc2(x), padded to 128 lanes; padded lanes carry a -1e30 bias.
    logits = jnp.dot(x, w2_ref[...], preferred_element_type=jnp.float32)  # [TB, LANE]
    logits = logits + b2_ref[...]

    # Numerically stable softmax over the class axis. Exact reciprocal:
    # approx=True (~2^-12 rel. error) would violate the 1e-5 tolerance, and
    # the divide is one scalar per row so its cost is negligible.
    m = jnp.max(logits, axis=1, keepdims=True)
    e = jnp.exp(logits - m)
    denom = jnp.sum(e, axis=1, keepdims=True)
    out_ref[...] = e * pl.reciprocal(denom, approx=False)

    # TODO(synk): torch.nn.Dropout(0.1) is applied to `x` after `output` is
    # computed and the result is discarded; it does not affect the returned
    # value, so it is intentionally omitted.


@functools.partial(jax.jit, static_argnames=("block_b",))
def classification_head(last_hidden_state, mask, w1, b1, w2, b2, *, block_b=None):
    """Pallas wrapper. `mask` only feeds the (absent) backbone and is ignored,
    matching torch.mean(dim=1) on last_hidden_state."""
    del mask
    b, s, h = last_hidden_state.shape
    sh = s * h
    fc1_dim = w1.shape[1]
    c = w2.shape[1]

    # Batch tile: multiple of 8 sublanes. When more than one tile is needed,
    # default to ~half the batch (rounded to 8) so the grid has >= 2 steps and
    # the "parallel" batch axis can be sharded across both v7x TensorCores;
    # cap at MAX_BLOCK_B to stay inside per-generation scoped-VMEM limits.
    if block_b is None:
        b8 = _round_up(b, 8)
        if b8 <= 8:
            block_b = b8
        else:
            block_b = min(MAX_BLOCK_B, _round_up(-(-b8 // 2), 8))
    bp = _round_up(b, block_b)

    # Lane-dense activations: [B, S, H] -> [B, S*H] (row-major, s-major flatten).
    hid = last_hidden_state.astype(jnp.float32).reshape(b, sh)
    if bp != b:
        hid = jnp.pad(hid, ((0, bp - b), (0, 0)))

    # Fused mean-pool + fc1 weight: W1f[s*H + h, f] = w1[h, f] / S.
    # (trace-time constant; exact fold of the 1/S scale)
    w1f = jnp.tile(w1.astype(jnp.float32) * (1.0 / s), (s, 1))   # [S*H, FC1]
    b1r = b1.reshape(1, -1).astype(jnp.float32)

    # Lane-dense class dim: pad fc2 to 128 output lanes; padded lanes get a
    # -1e30 bias so softmax assigns them exactly zero probability.
    w2p = jnp.zeros((fc1_dim, LANE), jnp.float32).at[:, :c].set(w2.astype(jnp.float32))
    b2p = jnp.full((1, LANE), NEG_INF, jnp.float32).at[:, :c].set(
        b2.reshape(1, -1).astype(jnp.float32))

    out = pl.pallas_call(
        head_kernel,
        out_shape=jax.ShapeDtypeStruct((bp, LANE), jnp.float32),
        grid=(bp // block_b,),
        in_specs=[
            pl.BlockSpec((block_b, sh), lambda i: (i, 0)),       # batched activations
            pl.BlockSpec((sh, fc1_dim), lambda i: (0, 0)),       # grid-invariant weights
            pl.BlockSpec((1, fc1_dim), lambda i: (0, 0)),
            pl.BlockSpec((fc1_dim, LANE), lambda i: (0, 0)),
            pl.BlockSpec((1, LANE), lambda i: (0, 0)),
        ],
        out_specs=pl.BlockSpec((block_b, LANE), lambda i: (i, 0)),
        compiler_params=pltpu.CompilerParams(
            dimension_semantics=("parallel",)),  # batch axis -> both TCs on v7x
    )(hid, w1f, b1r, w2p, b2p)

    # Slice back to the module's output shape. (For very large batches the
    # padded [bp, 128] output could be consumed directly to skip this pass.)
    return out[:b, :c]


def init_params(key):
    """Deterministic synthetic parameters (shapes from the module __init__)."""
    k1, k2, k3, k4 = jax.random.split(key, 4)
    # torch.nn.Linear stores weight as [out, in]; we keep [in, out] for x @ W.
    w1 = jax.random.normal(k1, (H, FC1), jnp.float32) * 0.05
    b1 = jax.random.normal(k2, (FC1,), jnp.float32) * 0.05
    w2 = jax.random.normal(k3, (FC1, NUM_CLASS), jnp.float32) * 0.05
    b2 = jax.random.normal(k4, (NUM_CLASS,), jnp.float32) * 0.05
    return w1, b1, w2, b2


def reference_head(last_hidden_state, w1, b1, w2, b2):
    pooled = jnp.mean(last_hidden_state, axis=1).astype(jnp.float32)
    x = jnp.maximum(pooled @ w1 + b1, 0.0)
    return jax.nn.softmax(x @ w2 + b2, axis=1)


if __name__ == "__main__":
    key = jax.random.PRNGKey(0)
    k_hid, k_param, k_big = jax.random.split(key, 3)

    # Synthetic backbone output (stands in for AutoModel(...).last_hidden_state).
    last_hidden_state = jax.random.normal(k_hid, (B, S, H), jnp.float32)
    attention_mask = jnp.ones((B, S), jnp.int32)
    w1, b1, w2, b2 = init_params(k_param)

    out = classification_head(last_hidden_state, attention_mask, w1, b1, w2, b2)
    out = jax.block_until_ready(out)

    ref = reference_head(last_hidden_state, w1, b1, w2, b2)
    assert out.shape == (B, NUM_CLASS)
    assert jnp.allclose(out, ref, atol=1e-5, rtol=1e-5), "mismatch vs reference"
    assert jnp.allclose(jnp.sum(out, axis=1), 1.0, atol=1e-5), "softmax rows must sum to 1"

    # Exercise the multi-step-grid path (default tiling -> 2 parallel steps).
    BIG_B = 64
    big_hid = jax.random.normal(k_big, (BIG_B, S, H), jnp.float32)
    big_mask = jnp.ones((BIG_B, S), jnp.int32)
    big_out = jax.block_until_ready(
        classification_head(big_hid, big_mask, w1, b1, w2, b2))
    big_ref = reference_head(big_hid, w1, b1, w2, b2)
    assert big_out.shape == (BIG_B, NUM_CLASS)
    assert jnp.allclose(big_out, big_ref, atol=1e-5, rtol=1e-5), "batched mismatch vs reference"

    print("KERNEL_OK")
</pallas_src>

<mosaic_0001>
module attributes {stable_mosaic.version = 11 : i64} {
  func.func @head_kernel(%arg0: i32, %arg1: memref<8x256xf32, #tpu.memory_space<vmem>>, %arg2: memref<256x16xf32, #tpu.memory_space<vmem>>, %arg3: memref<1x16xf32, #tpu.memory_space<vmem>>, %arg4: memref<16x128xf32, #tpu.memory_space<vmem>>, %arg5: memref<1x128xf32, #tpu.memory_space<vmem>>, %arg6: memref<8x128xf32, #tpu.memory_space<vmem>>) attributes {dimension_semantics = [#tpu.dimension_semantics<parallel>], iteration_bounds = array<i64: 1>, scalar_prefetch = 0 : i64, scratch_operands = 0 : i64, tpu.core_type = #tpu.core_type<tc>, window_params = [{transform_indices = @transform_0, window_bounds = array<i64: 8, 256>}, {pipeline_mode = #tpu.pipeline_mode<synchronous>, transform_indices = @transform_1, window_bounds = array<i64: 256, 16>}, {pipeline_mode = #tpu.pipeline_mode<synchronous>, transform_indices = @transform_2, window_bounds = array<i64: 1, 16>}, {pipeline_mode = #tpu.pipeline_mode<synchronous>, transform_indices = @transform_3, window_bounds = array<i64: 16, 128>}, {pipeline_mode = #tpu.pipeline_mode<synchronous>, transform_indices = @transform_4, window_bounds = array<i64: 1, 128>}, {transform_indices = @transform_5, window_bounds = array<i64: 8, 128>}]} {
    %c0 = arith.constant 0 : index
    %c0_0 = arith.constant 0 : index
    %0 = vector.load %arg1[%c0, %c0_0] : memref<8x256xf32, #tpu.memory_space<vmem>>, vector<8x256xf32>
    %c0_1 = arith.constant 0 : index
    %c0_2 = arith.constant 0 : index
    %1 = vector.load %arg2[%c0_1, %c0_2] : memref<256x16xf32, #tpu.memory_space<vmem>>, vector<256x16xf32>
    %cst = arith.constant dense<0.000000e+00> : vector<8x16xf32>
    %2 = tpu.matmul %0, %1, %cst {dimension_numbers = #tpu.dot_dimension_numbers<[1], [0], [0], [1], [0, 0, 1, 1], [], []>} : vector<8x256xf32>, vector<256x16xf32>, vector<8x16xf32> -> vector<8x16xf32>
    %c0_3 = arith.constant 0 : index
    %c0_4 = arith.constant 0 : index
    %3 = vector.load %arg3[%c0_3, %c0_4] : memref<1x16xf32, #tpu.memory_space<vmem>>, vector<1x16xf32>
    %4 = vector.broadcast %3 : vector<1x16xf32> to vector<8x16xf32>
    %5 = arith.addf %2, %4 : vector<8x16xf32>
    %cst_5 = arith.constant 0.000000e+00 : f32
    %6 = vector.broadcast %cst_5 : f32 to vector<8x16xf32>
    %7 = arith.maximumf %5, %6 : vector<8x16xf32>
    %c0_6 = arith.constant 0 : index
    %c0_7 = arith.constant 0 : index
    %8 = vector.load %arg4[%c0_6, %c0_7] : memref<16x128xf32, #tpu.memory_space<vmem>>, vector<16x128xf32>
    %cst_8 = arith.constant dense<0.000000e+00> : vector<8x128xf32>
    %9 = tpu.matmul %7, %8, %cst_8 {dimension_numbers = #tpu.dot_dimension_numbers<[1], [0], [0], [1], [0, 0, 1, 1], [], []>} : vector<8x16xf32>, vector<16x128xf32>, vector<8x128xf32> -> vector<8x128xf32>
    %c0_9 = arith.constant 0 : index
    %c0_10 = arith.constant 0 : index
    %10 = vector.load %arg5[%c0_9, %c0_10] : memref<1x128xf32, #tpu.memory_space<vmem>>, vector<1x128xf32>
    %11 = vector.broadcast %10 : vector<1x128xf32> to vector<8x128xf32>
    %12 = arith.addf %9, %11 : vector<8x128xf32>
    %cst_11 = arith.constant dense<0xFF800000> : vector<8xf32>
    %13 = vector.multi_reduction <maximumf>, %12, %cst_11 [1] : vector<8x128xf32> to vector<8xf32>
    %14 = vector.shape_cast %13 : vector<8xf32> to vector<8x1xf32>
    %15 = vector.broadcast %14 : vector<8x1xf32> to vector<8x128xf32>
    %16 = arith.subf %12, %15 : vector<8x128xf32>
    %17 = math.exp %16 : vector<8x128xf32>
    %cst_12 = arith.constant dense<0.000000e+00> : vector<8xf32>
    %18 = vector.multi_reduction <add>, %17, %cst_12 [1] : vector<8x128xf32> to vector<8xf32>
    %19 = vector.shape_cast %18 : vector<8xf32> to vector<8x1xf32>
    %20 = tpu.reciprocal %19 : vector<8x1xf32> -> vector<8x1xf32>
    %21 = vector.broadcast %20 : vector<8x1xf32> to vector<8x128xf32>
    %22 = arith.mulf %17, %21 : vector<8x128xf32>
    %c0_13 = arith.constant 0 : index
    %c0_14 = arith.constant 0 : index
    %23 = vector.load %arg6[%c0_13, %c0_14] : memref<8x128xf32, #tpu.memory_space<vmem>>, vector<8x128xf32>
    tpu.vector_store %arg6[%c0_13, %c0_14], %22 {strides = array<i32>} : memref<8x128xf32, #tpu.memory_space<vmem>>, vector<8x128xf32>,
    return
  }
  func.func @transform_0(%arg0: i32) -> (i32, i32) {
    %c0_i32 = arith.constant 0 : i32
    %c0_i32_0 = arith.constant 0 : i32
    return %arg0, %c0_i32 : i32, i32
  }
  func.func @transform_1(%arg0: i32) -> (i32, i32) {
    %c0_i32 = arith.constant 0 : i32
    %c0_i32_0 = arith.constant 0 : i32
    %c0_i32_1 = arith.constant 0 : i32
    return %c0_i32, %c0_i32_0 : i32, i32
  }
  func.func @transform_2(%arg0: i32) -> (i32, i32) {
    %c0_i32 = arith.constant 0 : i32
    %c0_i32_0 = arith.constant 0 : i32
    %c0_i32_1 = arith.constant 0 : i32
    return %c0_i32, %c0_i32_0 : i32, i32
  }
  func.func @transform_3(%arg0: i32) -> (i32, i32) {
    %c0_i32 = arith.constant 0 : i32
    %c0_i32_0 = arith.constant 0 : i32
    %c0_i32_1 = arith.constant 0 : i32
    return %c0_i32, %c0_i32_0 : i32, i32
  }
  func.func @transform_4(%arg0: i32) -> (i32, i32) {
    %c0_i32 = arith.constant 0 : i32
    %c0_i32_0 = arith.constant 0 : i32
    %c0_i32_1 = arith.constant 0 : i32
    return %c0_i32, %c0_i32_0 : i32, i32
  }
  func.func @transform_5(%arg0: i32) -> (i32, i32) {
    %c0_i32 = arith.constant 0 : i32
    %c0_i32_0 = arith.constant 0 : i32
    return %arg0, %c0_i32 : i32, i32
  }
}

</mosaic_0001>

<llo_original>
// kernel: classification_head.1
$region0: #{classification_head.1}
  #allocation0 [shape = 'u32[]', space=smem, size = 0x4, offset = 0x4, fixed_abs, tag = 'smem constant byte address 0x4 - core index']
  #allocation1 [shape = 'u32[144,128]{1,0:T(1,128)}', space=vmem, size = 0x12000, scoped, tag = 'internal scratch']
  %s0 = inlined_call_operand.vmem [shape: f32[8,256], index: 0, kind: input, shape index: {}]
  %s1 = inlined_call_operand.vmem [shape: f32[256,16], index: 1, kind: input, shape index: {}]
  %s2 = inlined_call_operand.vmem [shape: f32[1,16], index: 2, kind: input, shape index: {}]
  %s3 = inlined_call_operand.vmem [shape: f32[16,128], index: 3, kind: input, shape index: {}]
  %s4 = inlined_call_operand.vmem [shape: f32[1,128], index: 4, kind: input, shape index: {}]
  %s5 = inlined_call_operand.vmem [shape: f32[8,128], index: 5, kind: output, shape index: {}]
  %s6 = sld [smem:[#allocation0]]
  $region30: #{classification_head.1} parent=0
    _
  %s8 = ssub.s32 1, %s6
  %s9 = scalar_select 0, %s8, %s6
  // Predicated region
  $region2: #{classification_head.1} parent=0 // pred_check
    _
  $region3: #{classification_head.1} parent=0 // pred_check_branch
    %11 = sbr.rel (0) target = $region5
  $region4: #{classification_head.1} parent=0 // pred_region
    _
  $region5: #{classification_head.1} parent=0 // pred_fallthru
    _
  // Predicated region
  $region6: #{classification_head.1} parent=0 // pred_check
    _
  $region7: #{classification_head.1} parent=0 // pred_check_branch
    %13 = sbr.rel (0) target = $region9
  $region8: #{classification_head.1} parent=0 // pred_region
    _
  $region9: #{classification_head.1} parent=0 // pred_fallthru
    _
  // Predicated region
  $region10: #{classification_head.1} parent=0 // pred_check
    _
  $region11: #{classification_head.1} parent=0 // pred_check_branch
    %15 = sbr.rel (0) target = $region13
  $region12: #{classification_head.1} parent=0 // pred_region
    _
  $region13: #{classification_head.1} parent=0 // pred_fallthru
    _
  // Predicated region
  $region14: #{classification_head.1} parent=0 // pred_check
    _
  $region15: #{classification_head.1} parent=0 // pred_check_branch
    %17 = sbr.rel (0) target = $region17
  $region16: #{classification_head.1} parent=0 // pred_region
    _
  $region17: #{classification_head.1} parent=0 // pred_fallthru
    _
  // Predicated region
  $region18: #{classification_head.1} parent=0 // pred_check
    _
  $region19: #{classification_head.1} parent=0 // pred_check_branch
    %19 = sbr.rel (0) target = $region21
  $region20: #{classification_head.1} parent=0 // pred_region
    _
  $region21: #{classification_head.1} parent=0 // pred_fallthru
    _
  %v20 = vld [vmem:[%s0] sm:$0xff]
  %v21 = vld [vmem:[%s0 + $0x8] sm:$0xff]
  %v22 = vld [vmem:[%s1] sm:$0xff]
  %v23 = vld [vmem:[%s1 + $0x8] sm:$0xff]
  %v24 = vld [vmem:[%s1 + $0x10] sm:$0xff]
  %v25 = vld [vmem:[%s1 + $0x18] sm:$0xff]
  %v26 = vld [vmem:[%s1 + $0x20] sm:$0xff]
  %v27 = vld [vmem:[%s1 + $0x28] sm:$0xff]
  %v28 = vld [vmem:[%s1 + $0x30] sm:$0xff]
  %v29 = vld [vmem:[%s1 + $0x38] sm:$0xff]
  %v30 = vld [vmem:[%s1 + $0x40] sm:$0xff]
  %v31 = vld [vmem:[%s1 + $0x48] sm:$0xff]
  %v32 = vld [vmem:[%s1 + $0x50] sm:$0xff]
  %v33 = vld [vmem:[%s1 + $0x58] sm:$0xff]
  %v34 = vld [vmem:[%s1 + $0x60] sm:$0xff]
  %v35 = vld [vmem:[%s1 + $0x68] sm:$0xff]
  %v36 = vld [vmem:[%s1 + $0x70] sm:$0xff]
  %v37 = vld [vmem:[%s1 + $0x78] sm:$0xff]
  %v38 = vld [vmem:[%s1 + $0x80] sm:$0xff]
  %v39 = vld [vmem:[%s1 + $0x88] sm:$0xff]
  %v40 = vld [vmem:[%s1 + $0x90] sm:$0xff]
  %v41 = vld [vmem:[%s1 + $0x98] sm:$0xff]
  %v42 = vld [vmem:[%s1 + $0xa0] sm:$0xff]
  %v43 = vld [vmem:[%s1 + $0xa8] sm:$0xff]
  %v44 = vld [vmem:[%s1 + $0xb0] sm:$0xff]
  %v45 = vld [vmem:[%s1 + $0xb8] sm:$0xff]
  %v46 = vld [vmem:[%s1 + $0xc0] sm:$0xff]
  %v47 = vld [vmem:[%s1 + $0xc8] sm:$0xff]
  %v48 = vld [vmem:[%s1 + $0xd0] sm:$0xff]
  %v49 = vld [vmem:[%s1 + $0xd8] sm:$0xff]
  %v50 = vld [vmem:[%s1 + $0xe0] sm:$0xff]
  %v51 = vld [vmem:[%s1 + $0xe8] sm:$0xff]
  %v52 = vld [vmem:[%s1 + $0xf0] sm:$0xff]
  %v53 = vld [vmem:[%s1 + $0xf8] sm:$0xff]
  %v54 = vld [vmem:[%s2] sm:$0x1]
  %v56 = vlaneseq
  %v57 = vshrl.u32 %v56, 7
  %v58 = vsub.s32 0, %v57
  %v59 = vrot.slane %v54, %v58
  %61 = vmatprep.subr.mxu0 0.0
  %62 = vmatpush1.msra.mxu0 %v37
  %63 = vmatprep.subr.mxu0 0.0
  %64 = vmatpush1.msra.mxu0 %v36
  %65 = vmatprep.subr.mxu0 0.0
  %66 = vmatpush1.msra.mxu0 %v35
  %67 = vmatprep.subr.mxu0 0.0
  %68 = vmatpush1.msra.mxu0 %v34
  %69 = vmatprep.subr.mxu0 0.0
  %70 = vmatpush1.msra.mxu0 %v33
  %71 = vmatprep.subr.mxu0 0.0
  %72 = vmatpush1.msra.mxu0 %v32
  %73 = vmatprep.subr.mxu0 0.0
  %74 = vmatpush1.msra.mxu0 %v31
  %75 = vmatprep.subr.mxu0 0.0
  %76 = vmatpush1.msra.mxu0 %v30
  %77 = vmatprep.subr.mxu0 0.0
  %78 = vmatpush1.msra.mxu0 %v29
  %79 = vmatprep.subr.mxu0 0.0
  %80 = vmatpush1.msra.mxu0 %v28
  %81 = vmatprep.subr.mxu0 0.0
  %82 = vmatpush1.msra.mxu0 %v27
  %83 = vmatprep.subr.mxu0 0.0
  %84 = vmatpush1.msra.mxu0 %v26
  %85 = vmatprep.subr.mxu0 0.0
  %86 = vmatpush1.msra.mxu0 %v25
  %87 = vmatprep.subr.mxu0 0.0
  %88 = vmatpush1.msra.mxu0 %v24
  %89 = vmatprep.subr.mxu0 0.0
  %90 = vmatpush1.msra.mxu0 %v23
  %91 = vmatprep.subr.mxu0 0.0
  %92 = vmatpush1.msra.mxu0 %v22
  %93 = vmatprep.subr.mxu0 0.0
  %94 = vmatpush2.msra.mxu0 %v53
  %95 = vmatprep.subr.mxu0 0.0
  %96 = vmatpush2.msra.mxu0 %v52
  %97 = vmatprep.subr.mxu0 0.0
  %98 = vmatpush2.msra.mxu0 %v51
  %99 = vmatprep.subr.mxu0 0.0
  %100 = vmatpush2.msra.mxu0 %v50
  %101 = vmatprep.subr.mxu0 0.0
  %102 = vmatpush2.msra.mxu0 %v49
  %103 = vmatprep.subr.mxu0 0.0
  %104 = vmatpush2.msra.mxu0 %v48
  %105 = vmatprep.subr.mxu0 0.0
  %106 = vmatpush2.msra.mxu0 %v47
  %107 = vmatprep.subr.mxu0 0.0
  %108 = vmatpush2.msra.mxu0 %v46
  %109 = vmatprep.subr.mxu0 0.0
  %110 = vmatpush2.msra.mxu0 %v45
  %111 = vmatprep.subr.mxu0 0.0
  %112 = vmatpush2.msra.mxu0 %v44
  %113 = vmatprep.subr.mxu0 0.0
  %114 = vmatpush2.msra.mxu0 %v43
  %115 = vmatprep.subr.mxu0 0.0
  %116 = vmatpush2.msra.mxu0 %v42
  %117 = vmatprep.subr.mxu0 0.0
  %118 = vmatpush2.msra.mxu0 %v41
  %119 = vmatprep.subr.mxu0 0.0
  %120 = vmatpush2.msra.mxu0 %v40
  %121 = vmatprep.subr.mxu0 0.0
  %122 = vmatpush2.msra.mxu0 %v39
  %123 = vmatprep.subr.mxu0 0.0
  %124 = vmatpush2.msra.mxu0 %v38
  %125 = vmatprep.mubr.f32.mxu0 %v21
  %126 = vmatmul.mubr.f32.gmra.mxu0 %v20
  %v127 = vpop.f32.mrf.mxu0
  %v128 = vadd.f32 %v59, %v127
  %v129 = vpop.f32.mrf.mxu0
  %130 = vdwg.mxu0
  %v131 = vmax.f32 %v128, 0.0
  %v132 = vld [vmem:[%s3] sm:$0xff]
  %v133 = vld [vmem:[%s3 + $0x8] sm:$0xff]
  %v134 = vld [vmem:[%s4] sm:$0x1]
  %v136 = vlaneseq
  %v137 = vshrl.u32 %v136, 7
  %v138 = vsub.s32 0, %v137
  %v139 = vrot.slane %v134, %v138
  %vm141 = vcmask 130048
  %v143 = vsel %vm141, %v131, 0
  %145 = vmatprep.subr.mxu0 0.0
  %146 = vmatpush1.msra.mxu0 0.0
  %147 = vmatprep.subr.mxu0 0.0
  %148 = vmatpush1.msra.mxu0 0.0
  %149 = vmatprep.subr.mxu0 0.0
  %150 = vmatpush1.msra.mxu0 0.0
  %151 = vmatprep.subr.mxu0 0.0
  %152 = vmatpush1.msra.mxu0 0.0
  %153 = vmatprep.subr.mxu0 0.0
  %154 = vmatpush1.msra.mxu0 0.0
  %155 = vmatprep.subr.mxu0 0.0
  %156 = vmatpush1.msra.mxu0 0.0
  %157 = vmatprep.subr.mxu0 0.0
  %158 = vmatpush1.msra.mxu0 0.0
  %159 = vmatprep.subr.mxu0 0.0
  %160 = vmatpush1.msra.mxu0 0.0
  %161 = vmatprep.subr.mxu0 0.0
  %162 = vmatpush1.msra.mxu0 0.0
  %163 = vmatprep.subr.mxu0 0.0
  %164 = vmatpush1.msra.mxu0 0.0
  %165 = vmatprep.subr.mxu0 0.0
  %166 = vmatpush1.msra.mxu0 0.0
  %167 = vmatprep.subr.mxu0 0.0
  %168 = vmatpush1.msra.mxu0 0.0
  %169 = vmatprep.subr.mxu0 0.0
  %170 = vmatpush1.msra.mxu0 0.0
  %171 = vmatprep.subr.mxu0 0.0
  %172 = vmatpush1.msra.mxu0 0.0
  %173 = vmatprep.subr.mxu0 0.0
  %174 = vmatpush1.msra.mxu0 %v133
  %175 = vmatprep.subr.mxu0 0.0
  %176 = vmatpush1.msra.mxu0 %v132
  %177 = vmatprep.subr.mxu0 0.0
  %178 = vmatpush2.msra.mxu0 0.0
  %179 = vmatprep.subr.mxu0 0.0
  %180 = vmatpush2.msra.mxu0 0.0
  %181 = vmatprep.subr.mxu0 0.0
  %182 = vmatpush2.msra.mxu0 0.0
  %183 = vmatprep.subr.mxu0 0.0
  %184 = vmatpush2.msra.mxu0 0.0
  %185 = vmatprep.subr.mxu0 0.0
  %186 = vmatpush2.msra.mxu0 0.0
  %187 = vmatprep.subr.mxu0 0.0
  %188 = vmatpush2.msra.mxu0 0.0
  %189 = vmatprep.subr.mxu0 0.0
  %190 = vmatpush2.msra.mxu0 0.0
  %191 = vmatprep.subr.mxu0 0.0
  %192 = vmatpush2.msra.mxu0 0.0
  %193 = vmatprep.subr.mxu0 0.0
  %194 = vmatpush2.msra.mxu0 0.0
  %195 = vmatprep.subr.mxu0 0.0
  %196 = vmatpush2.msra.mxu0 0.0
  %197 = vmatprep.subr.mxu0 0.0
  %198 = vmatpush2.msra.mxu0 0.0
  %199 = vmatprep.subr.mxu0 0.0
  %200 = vmatpush2.msra.mxu0 0.0
  %201 = vmatprep.subr.mxu0 0.0
  %202 = vmatpush2.msra.mxu0 0.0
  %203 = vmatprep.subr.mxu0 0.0
  %204 = vmatpush2.msra.mxu0 0.0
  %205 = vmatprep.subr.mxu0 0.0
  %206 = vmatpush2.msra.mxu0 0.0
  %207 = vmatprep.subr.mxu0 0.0
  %208 = vmatpush2.msra.mxu0 0.0
  %209 = vmatprep.mubr.f32.mxu0 0.0
  %210 = vmatmul.mubr.f32.gmra.mxu0 %v143
  %v211 = vpop.f32.mrf.mxu0
  %v212 = vadd.f32 %v139, %v211
  %v213 = vpop.f32.mrf.mxu0
  %214 = vdwg.mxu0
  %215 = vmax.xlane.f32.xlu0 %v212
  %v216 = vpop.xlane.xlu0 %215
  %v217 = vsub.f32 %v212, %v216
  %v218 = vmul.f32 %v217, 1.442695
  %v219 = vpow.pop %v218
  %220 = vadd.xlane.f32.xlu0 %v219
  %v221 = vpop.xlane.xlu0 %220
  %v222 = vrcp.pop %v221
  %v223 = vmul.f32 %v219, %v222
  %224 = vst [vmem:[%s5] sm:$0xff] %v223
  // Predicated region
  $region22: #{classification_head.1} parent=0 // pred_check
    _
  $region23: #{classification_head.1} parent=0 // pred_check_branch
    %226 = sbr.rel (0) target = $region25
  $region24: #{classification_head.1} parent=0 // pred_region
    _
  $region25: #{classification_head.1} parent=0 // pred_fallthru
    _
  // Predicated region
  $region26: #{classification_head.1} parent=0 // pred_check
    _
  $region27: #{classification_head.1} parent=0 // pred_check_branch
    %228 = sbr.rel (0) target = $region29
  $region28: #{classification_head.1} parent=0 // pred_region
    _
  $region29: #{classification_head.1} parent=0 // pred_fallthru
    _

</llo_original>
